<compile_context>
chip_gen: v7x
topology: tpu7x:2x2x1
jax: 0.10.0
libtpu: 0.0.40
codegen_flags: <defaults>
</compile_context>

<pallas_src>
import functools

import jax
import jax.numpy as jnp
from jax.experimental import pallas as pl
from jax.experimental.pallas import tpu as pltpu


def _round_up(x, m):
    return ((x + m - 1) // m) * m


def _int_pow(x, n):
    """x ** n for a static positive integer n, via VPU multiplies."""
    assert n >= 1
    result = None
    base = x
    while n > 0:
        if n & 1:
            result = base if result is None else result * base
        n >>= 1
        if n:
            base = base * base
    return result


def _pairwise_distance_kernel(x1_ref, x2_ref, out_ref, acc_ref, *,
                              p, eps, d_total, tile_d, mask_d):
    dj = pl.program_id(1)

    @pl.when(dj == 0)
    def _():
        acc_ref[...] = jnp.zeros_like(acc_ref)

    # Upcast to f32 so the reduction over D accumulates in full precision
    # (no-op for f32 inputs).
    x1 = x1_ref[...].astype(jnp.float32)
    x2 = x2_ref[...].astype(jnp.float32)

    if p == 2.0 and eps == 0.0:
        d = x1 - x2                        # abs redundant under squaring
    else:
        d = jnp.abs(x1 - x2) + eps         # (tile_n, tile_d), > 0

    # Per-element (|diff| + eps) ** p, preferring VPU multiplies over the
    # log/exp-based pow on the single EUP slot.
    if p == 1.0:
        contrib = d
    elif p == 2.0:
        contrib = d * d
    elif float(p).is_integer() and 1.0 < p <= 16.0:
        contrib = _int_pow(d, int(p))
    else:
        contrib = jnp.power(d, p)

    if mask_d:
        # Ragged last D chunk: zero the contributions of lanes past D.
        lane = jax.lax.broadcasted_iota(jnp.int32, contrib.shape, 1)
        contrib = jnp.where(dj * tile_d + lane < d_total, contrib, 0.0)

    acc_ref[...] += jnp.sum(contrib, axis=1, keepdims=True)

    @pl.when(dj == pl.num_programs(1) - 1)
    def _():
        s = acc_ref[...]                   # (tile_n, 1) f32
        if p == 1.0:
            res = s
        elif p == 2.0:
            res = jnp.sqrt(s)
        elif p == 4.0:
            res = jnp.sqrt(jnp.sqrt(s))
        else:
            res = jnp.power(s, 1.0 / p)    # one pow per row; negligible
        out_ref[...] = res.astype(out_ref.dtype)


def pairwise_distance(x1, x2, p=2.0, eps=1e-6, tile_n=None, tile_d=None):
    assert x1.shape == x2.shape, "x1 and x2 must have the same shape"
    N, D = x1.shape
    dtype = x1.dtype
    itemsize = jnp.dtype(dtype).itemsize
    p = float(p)

    # Sublane granularity: 8 rows for 32-bit, 16 for 16-bit, 32 for 8-bit.
    sub = max(8, 32 // itemsize)
    # Size tiles with f32-equivalent, lane-padded bytes so (a) bf16 blocks that
    # get upcast to f32 intermediates and (b) lane padding to 128 can't blow
    # the VMEM budget.
    size_bytes = max(itemsize, 4)
    block_budget = 4 * 1024 * 1024   # per input block; 2 inputs x 2 buffers = 16 MiB

    # Tile over D only when even a minimal (sub, D) block would exceed the
    # budget (very large D; matters most on v7x's 64 MiB VMEM).
    if tile_d is None:
        if sub * _round_up(D, 128) * size_bytes <= block_budget:
            tile_d = D
        else:
            tile_d = max(128, ((block_budget // (sub * size_bytes)) // 128) * 128)
    else:
        tile_d = min(int(tile_d), D)
        if tile_d != D:
            tile_d = max(128, (tile_d // 128) * 128)   # lane-dim constraint
    num_d = pl.cdiv(D, tile_d)
    mask_d = (D % tile_d) != 0

    # Row tile: fill the per-block budget, then clamp so the parallel row axis
    # has >=2 (ideally 4) steps when N allows (v7x megacore + pipelining).
    n_ceil = _round_up(N, sub)
    if tile_n is None:
        tile_n = block_budget // max(1, _round_up(tile_d, 128) * size_bytes)
    tile_n = max(sub, min((int(tile_n) // sub) * sub, n_ceil))
    if n_ceil >= 2 * sub:
        desired_steps = 4 if n_ceil >= 4 * sub else 2
        cap = _round_up(pl.cdiv(n_ceil, desired_steps), sub)
        tile_n = max(sub, min(tile_n, cap))
    num_n = pl.cdiv(N, tile_n)

    kernel = functools.partial(
        _pairwise_distance_kernel, p=p, eps=float(eps),
        d_total=D, tile_d=tile_d, mask_d=mask_d)

    if p == 1.0:
        transcendentals = 0
    elif float(p).is_integer():
        transcendentals = N                       # one root per row
    else:
        transcendentals = 2 * N * D + 2 * N       # log/exp pow per element
    cost = pl.CostEstimate(
        flops=5 * N * D,
        transcendentals=transcendentals,
        bytes_accessed=2 * N * D * itemsize + N * itemsize,
    )

    out = pl.pallas_call(
        kernel,
        out_shape=jax.ShapeDtypeStruct((N, 1), dtype),
        grid_spec=pltpu.PrefetchScalarGridSpec(
            num_scalar_prefetch=0,
            grid=(num_n, num_d),
            in_specs=[
                pl.BlockSpec((tile_n, tile_d), lambda i, j: (i, j)),
                pl.BlockSpec((tile_n, tile_d), lambda i, j: (i, j)),
            ],
            out_specs=pl.BlockSpec((tile_n, 1), lambda i, j: (i, 0)),
            scratch_shapes=[pltpu.VMEM((tile_n, 1), jnp.float32)],
        ),
        compiler_params=pltpu.CompilerParams(
            dimension_semantics=("parallel", "arbitrary"),
            vmem_limit_bytes=48 * 1024 * 1024,
        ),
        cost_estimate=cost,
    )(x1, x2)
    return out


if __name__ == "__main__":
    key = jax.random.PRNGKey(0)
    k1, k2, k3, k4 = jax.random.split(key, 4)

    def ref(a, b, p, eps=1e-6):
        d = jnp.abs(a.astype(jnp.float32) - b.astype(jnp.float32)) + eps
        return jnp.power(jnp.sum(jnp.power(d, p), axis=1, keepdims=True), 1.0 / p)

    # Small shapes; N deliberately not a multiple of 8 to exercise the ragged
    # (un-padded) last row block.
    N, D = 10, 32
    eps = 1e-6
    x1 = jax.random.normal(k1, (N, D), dtype=jnp.float32)
    x2 = jax.random.normal(k2, (N, D), dtype=jnp.float32)

    # p = 2 fast path (the common use-case of the module).
    out2 = jax.block_until_ready(pairwise_distance(x1, x2, p=2.0, eps=eps))
    assert out2.shape == (N, 1)
    assert jnp.allclose(out2, ref(x1, x2, 2.0, eps), rtol=1e-5, atol=1e-5)

    # p = 1 fast path.
    out1 = jax.block_until_ready(pairwise_distance(x1, x2, p=1.0, eps=eps))
    assert jnp.allclose(out1, ref(x1, x2, 1.0, eps), rtol=1e-5, atol=1e-5)

    # Integer-p fast path (VPU multiplies, no per-element EUP pow).
    out3 = jax.block_until_ready(pairwise_distance(x1, x2, p=3.0, eps=eps))
    assert jnp.allclose(out3, ref(x1, x2, 3.0, eps), rtol=1e-4, atol=1e-4)

    # Non-integer p: generic jnp.power fallback.
    outg = jax.block_until_ready(pairwise_distance(x1, x2, p=2.5, eps=eps))
    assert jnp.allclose(outg, ref(x1, x2, 2.5, eps), rtol=1e-4, atol=1e-4)

    # bf16 inputs: bf16 loads, f32 accumulation, bf16 output.
    xb1 = x1.astype(jnp.bfloat16)
    xb2 = x2.astype(jnp.bfloat16)
    outb = jax.block_until_ready(pairwise_distance(xb1, xb2, p=2.0, eps=eps))
    assert outb.dtype == jnp.bfloat16
    assert jnp.allclose(outb.astype(jnp.float32), ref(xb1, xb2, 2.0, eps),
                        rtol=2e-2, atol=2e-2)

    # Force the D-tiled accumulator path (ragged last D chunk is masked).
    Nd, Dd = 24, 320
    y1 = jax.random.normal(k3, (Nd, Dd), dtype=jnp.float32)
    y2 = jax.random.normal(k4, (Nd, Dd), dtype=jnp.float32)
    outd = jax.block_until_ready(
        pairwise_distance(y1, y2, p=2.0, eps=eps, tile_d=128))
    assert jnp.allclose(outd, ref(y1, y2, 2.0, eps), rtol=1e-5, atol=1e-5)
    outd3 = jax.block_until_ready(
        pairwise_distance(y1, y2, p=3.0, eps=eps, tile_d=128))
    assert jnp.allclose(outd3, ref(y1, y2, 3.0, eps), rtol=1e-4, atol=1e-4)

    print("KERNEL_OK")
</pallas_src>

<mosaic_0001>
module attributes {stable_mosaic.version = 11 : i64} {
  func.func @_pairwise_distance_kernel(%arg0: i32, %arg1: i32, %arg2: memref<8x32xf32, #tpu.memory_space<vmem>>, %arg3: memref<8x32xf32, #tpu.memory_space<vmem>>, %arg4: memref<8x1xf32, #tpu.memory_space<vmem>>, %arg5: memref<8x1xf32, #tpu.memory_space<vmem>>) attributes {dimension_semantics = [#tpu.dimension_semantics<parallel>, #tpu.dimension_semantics<arbitrary>], iteration_bounds = array<i64: 2, 1>, scalar_prefetch = 0 : i64, scratch_operands = 1 : i64, tpu.core_type = #tpu.core_type<tc>, window_params = [{transform_indices = @transform_0, window_bounds = array<i64: 8, 32>}, {transform_indices = @transform_1, window_bounds = array<i64: 8, 32>}, {transform_indices = @transform_2, window_bounds = array<i64: 8, 1>}]} {
    %c0_i32 = arith.constant 0 : i32
    %0 = arith.cmpi eq, %arg1, %c0_i32 : i32
    %1 = arith.extui %0 : i1 to i32
    %c0_i32_0 = arith.constant 0 : i32
    %2 = arith.cmpi ne, %1, %c0_i32_0 : i32
    scf.if %2 {
      %cst_11 = arith.constant 0.000000e+00 : f32
      %18 = vector.broadcast %cst_11 : f32 to vector<8x1xf32>
      %c0_12 = arith.constant 0 : index
      %c0_13 = arith.constant 0 : index
      %19 = vector.load %arg5[%c0_12, %c0_13] : memref<8x1xf32, #tpu.memory_space<vmem>>, vector<8x1xf32>
      tpu.vector_store %arg5[%c0_12, %c0_13], %18 {strides = array<i32>} : memref<8x1xf32, #tpu.memory_space<vmem>>, vector<8x1xf32>,
    } else {
    }
    %c0 = arith.constant 0 : index
    %c0_1 = arith.constant 0 : index
    %3 = vector.load %arg2[%c0, %c0_1] : memref<8x32xf32, #tpu.memory_space<vmem>>, vector<8x32xf32>
    %c0_2 = arith.constant 0 : index
    %c0_3 = arith.constant 0 : index
    %4 = vector.load %arg3[%c0_2, %c0_3] : memref<8x32xf32, #tpu.memory_space<vmem>>, vector<8x32xf32>
    %5 = arith.subf %3, %4 : vector<8x32xf32>
    %6 = math.absf %5 : vector<8x32xf32>
    %cst = arith.constant 9.99999997E-7 : f32
    %7 = vector.broadcast %cst : f32 to vector<8x32xf32>
    %8 = arith.addf %6, %7 : vector<8x32xf32>
    %9 = arith.mulf %8, %8 : vector<8x32xf32>
    %c0_4 = arith.constant 0 : index
    %c0_5 = arith.constant 0 : index
    %10 = vector.load %arg5[%c0_4, %c0_5] : memref<8x1xf32, #tpu.memory_space<vmem>>, vector<8x1xf32>
    %cst_6 = arith.constant dense<0.000000e+00> : vector<8xf32>
    %11 = vector.multi_reduction <add>, %9, %cst_6 [1] : vector<8x32xf32> to vector<8xf32>
    %12 = vector.shape_cast %11 : vector<8xf32> to vector<8x1xf32>
    %13 = arith.addf %10, %12 : vector<8x1xf32>
    %c0_7 = arith.constant 0 : index
    %c0_8 = arith.constant 0 : index
    %14 = vector.load %arg5[%c0_7, %c0_8] : memref<8x1xf32, #tpu.memory_space<vmem>>, vector<8x1xf32>
    tpu.vector_store %arg5[%c0_7, %c0_8], %13 {strides = array<i32>} : memref<8x1xf32, #tpu.memory_space<vmem>>, vector<8x1xf32>,
    %c0_i32_9 = arith.constant 0 : i32
    %15 = arith.cmpi eq, %arg1, %c0_i32_9 : i32
    %16 = arith.extui %15 : i1 to i32
    %c0_i32_10 = arith.constant 0 : i32
    %17 = arith.cmpi ne, %16, %c0_i32_10 : i32
    scf.if %17 {
      %c0_11 = arith.constant 0 : index
      %c0_12 = arith.constant 0 : index
      %18 = vector.load %arg5[%c0_11, %c0_12] : memref<8x1xf32, #tpu.memory_space<vmem>>, vector<8x1xf32>
      %19 = math.sqrt %18 : vector<8x1xf32>
      %c0_13 = arith.constant 0 : index
      %c0_14 = arith.constant 0 : index
      %20 = vector.load %arg4[%c0_13, %c0_14] : memref<8x1xf32, #tpu.memory_space<vmem>>, vector<8x1xf32>
      tpu.vector_store %arg4[%c0_13, %c0_14], %19 {strides = array<i32>} : memref<8x1xf32, #tpu.memory_space<vmem>>, vector<8x1xf32>,
    } else {
    }
    return
  }
  func.func @transform_0(%arg0: i32, %arg1: i32) -> (i32, i32) {
    %c0_i32 = arith.constant 0 : i32
    return %arg0, %arg1 : i32, i32
  }
  func.func @transform_1(%arg0: i32, %arg1: i32) -> (i32, i32) {
    %c0_i32 = arith.constant 0 : i32
    return %arg0, %arg1 : i32, i32
  }
  func.func @transform_2(%arg0: i32, %arg1: i32) -> (i32, i32) {
    %c0_i32 = arith.constant 0 : i32
    %c0_i32_0 = arith.constant 0 : i32
    return %arg0, %c0_i32 : i32, i32
  }
}

</mosaic_0001>

<llo_original>
// kernel: tpu_custom_call.1
$region0: #{tpu_custom_call.1}
  #allocation0 [shape = 'u32[]', space=smem, size = 0x4, offset = 0x4, fixed_abs, tag = 'smem constant byte address 0x4 - core index']
  #allocation1 [shape = 'u32[144,128]{1,0:T(1,128)}', space=vmem, size = 0x12000, scoped, tag = 'internal scratch']
  #allocation2 [shape = 'f32[8,1]{1,0:T(8,128)}', space=vmem, size = 0x1000, scoped, tag = 'scratch operand']
  %s0 = inlined_call_operand.hbm [shape: f32[10,32], index: 0, kind: input, shape index: {}]
  %s1 = inlined_call_operand.hbm [shape: f32[10,32], index: 1, kind: input, shape index: {}]
  %s2 = inlined_call_operand.vmem [shape: f32[10,1], index: 2, kind: output, shape index: {}]
  %s3 = sld [smem:[#allocation0]]
  $region57: #{tpu_custom_call.1} parent=0
    _
  %s5 = ssub.s32 1, %s3
  %s6 = scalar_select 0, %s5, %s3
  $region1: #{tpu_custom_call.1} parent=0
    #allocation3 [shape = 'u8[8192]{0}', space=vmem, size = 0x2000, scoped, tag = 'input window, operand 0']
    #allocation4 [shape = 's32[2]{0}', space=sflag, size = 0x8, scoped, tag = 'scoped memory for tpu_custom_call.1']
    #allocation5 [shape = 'u8[8192]{0}', space=vmem, size = 0x2000, scoped, tag = 'input window, operand 1']
    #allocation6 [shape = 's32[2]{0}', space=sflag, size = 0x8, scoped, tag = 'scoped memory for tpu_custom_call.1']
    %7 = vsyncpa [#allocation4], 0
    %s8 = scalar_lea.sflag [#allocation4], 1
    %9 = vsyncpa %s8, 0
    %10 = vsyncpa [#allocation6], 0
    %s11 = scalar_lea.sflag [#allocation6], 1
    %12 = vsyncpa %s11, 0
    loop: start=0, step=1, limit=4
    $region2: #{tpu_custom_call.1} parent=1 // loop_pre_header
      _
    $region3: #{tpu_custom_call.1} parent=1 // loop_header
      %s14 = sphi 0, %s18
      %p15 = scmp.ge.s32.totalorder %s14, 4
      %s21 = sphi 0, %s33
      %s22 = sphi 0, %s29
      %s23 = sphi 0, %s21
      %s24 = sphi 0, %s22
      %s25 = sphi 0, %s23
      %s26 = sphi 0, %s24
      %s38 = sphi 0, %s40
      %s41 = sphi 0, %s38
      %s42 = sphi 0, %s41
      %s58 = sphi 0, %s42
      %s66 = sphi 0, %s68
      %s69 = sphi 0, %s66
      %s70 = sphi 0, %s69
      %s86 = sphi 0, %s70
      %s92 = sphi 0, %s94
      %s95 = sphi 0, %s92
      %s96 = sphi 0, %s95
      %s112 = sphi 0, %s96
    $region4: #{tpu_custom_call.1} parent=1 // loop_header_branch
      %17 = sbr.rel (%p15) target = $region8
    $region5: #{tpu_custom_call.1} parent=1 // loop_body
      %s19 = ssub.s32 %s14, 1
      %s20 = ssub.s32 %s14, 2
      %s27 = sadd.s32 1, %s22
      %p28 = scmp.ge.s32.totalorder %s27, 1
      %s29 = scalar_select %p28, 0, %s27
      %s30 = sadd.s32 1, %s21
      %s31 = scalar_select %p28, %s30, %s21
      %p32 = scmp.ge.s32.totalorder %s31, 2
      %s33 = scalar_select %p32, 0, %s31
      %s34 = ssub.s32 %s21, %s33
      %s35 = ssub.s32 %s22, %s29
      %s36 = sor.u32 %s34, %s35
      %p37 = scmp.eq.s32.totalorder %s36, 0
      %s39 = sadd.s32 %s38, 1
      %s40 = scalar_select %p37, %s38, %s39
      %p43 = pneg %p37
      %p44 = scmp.eq.s32.totalorder %s14, 1
      %p45 = por %p43, %p44
      %p46 = scmp.ne.s32.totalorder %s38, %s41
      %p47 = scmp.eq.s32.totalorder %s14, 0
      %p48 = por %p46, %p47
      %p49 = scmp.ne.s32.totalorder %s38, %s41
      %p50 = scmp.eq.s32.totalorder %s19, 1
      %p51 = por %p49, %p50
      %p52 = scmp.ne.s32.totalorder %s41, %s42
      %p53 = scmp.eq.s32.totalorder %s19, 0
      %p54 = por %p52, %p53
      %p55 = scmp.ne.s32.totalorder %s41, %s42
      %p56 = scmp.eq.s32.totalorder %s20, 1
      %p57 = por %p55, %p56
      %p59 = scmp.ne.s32.totalorder %s42, %s58
      %p60 = scmp.eq.s32.totalorder %s20, 0
      %p61 = por %p59, %p60
      %s62 = ssub.s32 %s21, %s33
      %s63 = ssub.s32 %s22, %s29
      %s64 = sor.u32 %s62, %s63
      %p65 = scmp.eq.s32.totalorder %s64, 0
      %s67 = sadd.s32 %s66, 1
      %s68 = scalar_select %p65, %s66, %s67
      %p71 = pneg %p65
      %p72 = scmp.eq.s32.totalorder %s14, 1
      %p73 = por %p71, %p72
      %p74 = scmp.ne.s32.totalorder %s66, %s69
      %p75 = scmp.eq.s32.totalorder %s14, 0
      %p76 = por %p74, %p75
      %p77 = scmp.ne.s32.totalorder %s66, %s69
      %p78 = scmp.eq.s32.totalorder %s19, 1
      %p79 = por %p77, %p78
      %p80 = scmp.ne.s32.totalorder %s69, %s70
      %p81 = scmp.eq.s32.totalorder %s19, 0
      %p82 = por %p80, %p81
      %p83 = scmp.ne.s32.totalorder %s69, %s70
      %p84 = scmp.eq.s32.totalorder %s20, 1
      %p85 = por %p83, %p84
      %p87 = scmp.ne.s32.totalorder %s70, %s86
      %p88 = scmp.eq.s32.totalorder %s20, 0
      %p89 = por %p87, %p88
      %s90 = ssub.s32 %s21, %s33
      %p91 = scmp.eq.s32.totalorder %s90, 0
      %s93 = sadd.s32 %s92, 1
      %s94 = scalar_select %p91, %s92, %s93
      %p97 = pneg %p91
      %p98 = scmp.eq.s32.totalorder %s14, 1
      %p99 = por %p97, %p98
      %p100 = scmp.ne.s32.totalorder %s92, %s95
      %p101 = scmp.eq.s32.totalorder %s14, 0
      %p102 = por %p100, %p101
      %p103 = scmp.ne.s32.totalorder %s92, %s95
      %p104 = scmp.eq.s32.totalorder %s19, 1
      %p105 = por %p103, %p104
      %p106 = scmp.ne.s32.totalorder %s95, %s96
      %p107 = scmp.eq.s32.totalorder %s19, 0
      %p108 = por %p106, %p107
      %p109 = scmp.ne.s32.totalorder %s95, %s96
      %p110 = scmp.eq.s32.totalorder %s20, 1
      %p111 = por %p109, %p110
      %p113 = scmp.ne.s32.totalorder %s96, %s112
      %p114 = scmp.eq.s32.totalorder %s20, 0
      %p115 = por %p113, %p114
      %p116 = scmp.le.s32.totalorder 1, %s14
      %p117 = scmp.lt.s32.totalorder %s14, 3
      %p118 = pnand %p116, %p117
      %p119 = pneg %p118
      // Predicated region
      $region9: #{tpu_custom_call.1} parent=5 // pred_check
        _
      $region10: #{tpu_custom_call.1} parent=5 // pred_check_branch
        %121 = sbr.rel (%p118) target = $region12
      $region11: #{tpu_custom_call.1} parent=5 // pred_region
        %s122 = ssub.s32 %s14, 1
      $region12: #{tpu_custom_call.1} parent=5 // pred_fallthru
        _
      %p123 = scmp.lt.s32.totalorder %s14, 2
      // Predicated region
      $region13: #{tpu_custom_call.1} parent=5 // pred_check
        %p124 = pneg %p123
      $region14: #{tpu_custom_call.1} parent=5 // pred_check_branch
        %126 = sbr.rel (%p124) target = $region16
      $region15: #{tpu_custom_call.1} parent=5 // pred_region
        // Predicated region
        $region17: #{tpu_custom_call.1} parent=15 // pred_check
          %p127 = pneg %p48
        $region18: #{tpu_custom_call.1} parent=15 // pred_check_branch
          %129 = sbr.rel (%p127) target = $region20
        $region19: #{tpu_custom_call.1} parent=15 // pred_region
          %s130 = sand.u32 %s38, 1
          %s131 = scalar_lea.sflag [#allocation4], %s130
          %s132 = sand.u32 %s38, 1
          %s133 = smul.addr %s132, 8
          %s134 = scalar_lea.vmem [#allocation3], %s133
          %s136 = ssub.s32 128, 128
          %137 = vsyncadd %s131, %s136
          %s138 = sadd.s32 %s22, %s21
          %s139 = smul.addr %s138, 128
          %s140 = scalar_lea.hbm %s0, %s139
          %s142 = sshll.u32 %s134, 4
          %s143 = int_to_ptr.vmem [resolvable:$true] %s142
          %145 = dma.hbm_to_vmem [thread:$0]  %s140, 128, %s143, %s131
        $region20: #{tpu_custom_call.1} parent=15 // pred_fallthru
          _
        // Predicated region
        $region21: #{tpu_custom_call.1} parent=15 // pred_check
          %p146 = pneg %p76
        $region22: #{tpu_custom_call.1} parent=15 // pred_check_branch
          %148 = sbr.rel (%p146) target = $region24
        $region23: #{tpu_custom_call.1} parent=15 // pred_region
          %s149 = sand.u32 %s66, 1
          %s150 = scalar_lea.sflag [#allocation6], %s149
          %s151 = sand.u32 %s66, 1
          %s152 = smul.addr %s151, 8
          %s153 = scalar_lea.vmem [#allocation5], %s152
          %s155 = ssub.s32 128, 128
          %156 = vsyncadd %s150, %s155
          %s157 = sadd.s32 %s22, %s21
          %s158 = smul.addr %s157, 128
          %s159 = scalar_lea.hbm %s1, %s158
          %s161 = sshll.u32 %s153, 4
          %s162 = int_to_ptr.vmem [resolvable:$true] %s161
          %164 = dma.hbm_to_vmem [thread:$0]  %s159, 128, %s162, %s150
        $region24: #{tpu_custom_call.1} parent=15 // pred_fallthru
          _
      $region16: #{tpu_custom_call.1} parent=5 // pred_fallthru
        _
      %p165 = scmp.le.s32.totalorder 1, %s14
      %p166 = scmp.lt.s32.totalorder %s14, 3
      %p167 = pnand %p165, %p166
      %p168 = pneg %p167
      // Predicated region
      $region25: #{tpu_custom_call.1} parent=5 // pred_check
        _
      $region26: #{tpu_custom_call.1} parent=5 // pred_check_branch
        %170 = sbr.rel (%p167) target = $region28
      $region27: #{tpu_custom_call.1} parent=5 // pred_region
        %s171 = ssub.s32 %s14, 1
        %s172 = sand.u32 %s41, 1
        %s173 = scalar_lea.sflag [#allocation4], %s172
        %s174 = sand.u32 %s41, 1
        %s175 = smul.addr %s174, 8
        %s176 = scalar_lea.vmem [#allocation3], %s175
        // Predicated region
        $region29: #{tpu_custom_call.1} parent=27 // pred_check
          %p177 = pneg %p54
        $region30: #{tpu_custom_call.1} parent=27 // pred_check_branch
          %179 = sbr.rel (%p177) target = $region32
        $region31: #{tpu_custom_call.1} parent=27 // pred_region
          %180 = dma.done %s173, 128
        $region32: #{tpu_custom_call.1} parent=27 // pred_fallthru
          _
        %s181 = sand.u32 %s69, 1
        %s182 = scalar_lea.sflag [#allocation6], %s181
        %s183 = sand.u32 %s69, 1
        %s184 = smul.addr %s183, 8
        %s185 = scalar_lea.vmem [#allocation5], %s184
        // Predicated region
        $region33: #{tpu_custom_call.1} parent=27 // pred_check
          %p186 = pneg %p82
        $region34: #{tpu_custom_call.1} parent=27 // pred_check_branch
          %188 = sbr.rel (%p186) target = $region36
        $region35: #{tpu_custom_call.1} parent=27 // pred_region
          %189 = dma.done %s182, 128
        $region36: #{tpu_custom_call.1} parent=27 // pred_fallthru
          _
        %s190 = sand.u32 %s41, 1
        %s191 = scalar_lea.sflag [#allocation4], %s190
        %s192 = sand.u32 %s41, 1
        %s193 = smul.addr %s192, 8
        %s194 = scalar_lea.vmem [#allocation3], %s193
        %p195 = pneg %p54
        %p196 = pneg %p51
        %s197 = sand.u32 %s69, 1
        %s198 = scalar_lea.sflag [#allocation6], %s197
        %s199 = sand.u32 %s69, 1
        %s200 = smul.addr %s199, 8
        %s201 = scalar_lea.vmem [#allocation5], %s200
        %p202 = pneg %p82
        %p203 = pneg %p79
        %p204 = pneg %p108
        %p205 = pneg %p105
        %p206 = scmp.lt.s32.totalorder %s23, 1
        %s207 = scalar_select %p206, %s23, 1
        %s208 = smul.addr %s207, 8
        %s209 = scalar_lea.vmem %s2, %s208
        %p210 = scmp.lt.s32.totalorder %s23, 1
        %s211 = scalar_select %p210, %s23, 1
        %s212 = smul.addr %s211, 8
        %s213 = scalar_lea.vmem %s2, %s212
        %p214 = scmp.eq.s32.totalorder %s24, 0
        // Predicated region
        $region37: #{tpu_custom_call.1} parent=27 // pred_check
          %p215 = pneg %p214
        $region38: #{tpu_custom_call.1} parent=27 // pred_check_branch
          %217 = sbr.rel (%p215) target = $region40
        $region39: #{tpu_custom_call.1} parent=27 // pred_region
          %vm218 = vcmask 7168
          %219 = vst.msk [vmem:[#allocation2] sm:$0xff] %vm218, 0.0
        $region40: #{tpu_custom_call.1} parent=27 // pred_fallthru
          _
        %v220 = vld [vmem:[%s176] sm:$0xff]
        %v221 = vld [vmem:[%s185] sm:$0xff]
        %v222 = vsub.f32 %v220, %v221
        %v223 = vand.u32 2147483647, %v222
        %v224 = vadd.f32 %v223, 1e-06
        %v225 = vmul.f32 %v224, %v224
        %v226 = vld [vmem:[#allocation2] sm:$0xff]
        %vm227 = vcmask 261120
        %v228 = vsel %vm227, %v225, 0.0
        %229 = vadd.xlane.f32.xlu0 %v228
        %v230 = vpop.xlane.xlu0 %229
        %v231 = vadd.f32 %v226, %v230
        %vm232 = vcmask 7168
        %233 = vst.msk [vmem:[#allocation2] sm:$0xff] %vm232, %v231
        // Predicated region
        $region41: #{tpu_custom_call.1} parent=27 // pred_check
          %p234 = pneg %p214
        $region42: #{tpu_custom_call.1} parent=27 // pred_check_branch
          %236 = sbr.rel (%p234) target = $region44
        $region43: #{tpu_custom_call.1} parent=27 // pred_region
          %v237 = vld [vmem:[#allocation2] sm:$0xff]
          %v238 = vrsqrt.pop %v237
          %v239 = vmul.f32 %v237, %v238
          %vm240 = vcmp.eq.f32.partialorder %v237, inf
          %v241 = vsel %vm240, %v237, %v239
          %vm242 = vcmp.eq.f32.partialorder %v237, 0.0
          %v243 = vand.u32 %v237, 2147483648
          %v244 = vsel %vm242, %v243, %v241
          %245 = vst.msk [vmem:[%s213] sm:$0xff] %vm232, %v244
        $region44: #{tpu_custom_call.1} parent=27 // pred_fallthru
          _
        %p246 = scmp.lt.s32.totalorder %s23, 1
        %s247 = scalar_select %p246, %s23, 1
        %s248 = smul.addr %s247, 8
        %s249 = scalar_lea.vmem %s2, %s248
        // Predicated region
        $region45: #{tpu_custom_call.1} parent=27 // pred_check
          %p250 = pneg %p105
        $region46: #{tpu_custom_call.1} parent=27 // pred_check_branch
          %252 = sbr.rel (%p250) target = $region48
        $region47: #{tpu_custom_call.1} parent=27 // pred_region
          _
        $region48: #{tpu_custom_call.1} parent=27 // pred_fallthru
          _
      $region28: #{tpu_custom_call.1} parent=5 // pred_fallthru
        _
      %p253 = scmp.le.s32.totalorder 2, %s14
      // Predicated region
      $region49: #{tpu_custom_call.1} parent=5 // pred_check
        %p254 = pneg %p253
      $region50: #{tpu_custom_call.1} parent=5 // pred_check_branch
        %256 = sbr.rel (%p254) target = $region52
      $region51: #{tpu_custom_call.1} parent=5 // pred_region
        %s257 = ssub.s32 %s14, 2
        // Predicated region
        $region53: #{tpu_custom_call.1} parent=51 // pred_check
          %p258 = pneg %p111
        $region54: #{tpu_custom_call.1} parent=51 // pred_check_branch
          %260 = sbr.rel (%p258) target = $region56
        $region55: #{tpu_custom_call.1} parent=51 // pred_region
          %p261 = scmp.lt.s32.totalorder %s25, 1
          %s262 = scalar_select %p261, %s25, 1
          %s263 = smul.addr %s262, 8
          %s264 = scalar_lea.vmem %s2, %s263
        $region56: #{tpu_custom_call.1} parent=51 // pred_fallthru
          _
      $region52: #{tpu_custom_call.1} parent=5 // pred_fallthru
        _
    $region6: #{tpu_custom_call.1} parent=1 // loop_footer
      %s18 = sadd.s32 1, %s14
    $region7: #{tpu_custom_call.1} parent=1 // loop_footer_branch
      %13 = sbr.rel target = $region3
    $region8: #{tpu_custom_call.1} parent=1 // loop_exit
      _
    %265 = vsyncpa [#allocation4], 1
    %s266 = scalar_lea.sflag [#allocation4], 1
    %267 = vsyncpa %s266, 1
    %268 = vsyncpa [#allocation6], 1
    %s269 = scalar_lea.sflag [#allocation6], 1
    %270 = vsyncpa %s269, 1

</llo_original>
